<compile_context>
chip_gen: v6e
topology: v6e:2x2x1
jax: 0.10.0
libtpu: 0.0.40
codegen_flags: <defaults>
</compile_context>

<pallas_src>
import functools

import jax
import jax.numpy as jnp
from jax.experimental import pallas as pl
from jax.experimental.pallas import tpu as pltpu


def _mlp_kernel(ts_ref, c1_ref, w1_ref, w2_ref, b2_ref, w3_ref, b3_ref, o_ref):
    """One (batch, row-tile) step of the per-timestep MLP.

    ts_ref : (1, tile_s, D)  temperature rows
    c1_ref : (1, 1, H)       per-batch row = [lat,lon,alt] @ W1[D:] + b1  (f32)
    w1_ref : (D, H)          temperature part of layer-1 weights
    w2_ref : (H, H)
    b2_ref : (1, H)          f32
    w3_ref : (H, C)
    b3_ref : (C, 1)          f32
    o_ref  : (1, C, tile_s)  sigmoid output, lane-dense (rows on lanes)
    """
    cdt = w1_ref.dtype                                  # MXU operand dtype
    x = ts_ref[0].astype(cdt)                           # (tile_s, D)

    # conv_1 (+ folded coord/bias row) + relu
    h1 = jnp.dot(x, w1_ref[...], preferred_element_type=jnp.float32)
    h1 = jnp.maximum(h1 + c1_ref[0], 0.0)               # (tile_s, H) f32

    # conv_2 + relu
    h2 = jnp.dot(h1.astype(w2_ref.dtype), w2_ref[...],
                 preferred_element_type=jnp.float32)
    h2 = jnp.maximum(h2 + b2_ref[...], 0.0)             # (tile_s, H) f32

    # conv_3 + sigmoid, computed transposed so the output store is lane-dense.
    h2_t = h2.T                                          # (H, tile_s) XLU transpose
    C = w3_ref.shape[1]
    if C == 1:
        # H -> 1 projection on the VPU/XLU: broadcast-multiply + sublane reduce.
        logits_t = jnp.sum(h2_t * w3_ref[...].astype(jnp.float32),
                           axis=0, keepdims=True)        # (1, tile_s)
    else:
        logits_t = jnp.dot(w3_ref[...].T, h2_t.astype(w3_ref.dtype),
                           preferred_element_type=jnp.float32)  # (C, tile_s)
    logits_t = logits_t + b3_ref[...]
    o_ref[0] = jax.nn.sigmoid(logits_t).astype(o_ref.dtype)


@functools.partial(jax.jit, static_argnames=("max_rows_per_tile", "matmul_dtype"))
def degree_days_dnn_coord_forward(temperature, lat, lon, alt, params, *,
                                  max_rows_per_tile=2048, matmul_dtype=None):
    """Equivalent of DegreeDaysDNN_Coord.forward.

    temperature : (B, S, D) float
    lat/lon/alt : (B,) or (B, 1) per-batch coordinates
    params      : dense-layout conv weights
                  w1 (D+3, H), b1 (H,), w2 (H, H), b2 (H,), w3 (H, C), b3 (C,)
                  (conv_k.weight of shape (out,1,1,k) <-> dense (k, out))
    returns     : (B, S) if C == 1 else (B, C, S)
    """
    B, S, D = temperature.shape
    w1, b1 = params["w1"], params["b1"]
    w2, b2 = params["w2"], params["b2"]
    w3, b3 = params["w3"], params["b3"]
    H = w1.shape[1]
    C = w3.shape[1]

    cdt = jnp.float32 if matmul_dtype is None else matmul_dtype

    # Fold per-batch coords + b1 into one bias row per batch (tiny, plain JAX):
    #   c1[b] = [lat, lon, alt] @ W1[D:] + b1
    coords = jnp.stack(
        [lat.reshape(-1), lon.reshape(-1), alt.reshape(-1)], axis=-1
    ).astype(jnp.float32)                                          # (B, 3)
    c1 = (coords @ w1[D:].astype(jnp.float32)
          + b1.reshape(1, H).astype(jnp.float32)).reshape(B, 1, H)

    w1_ts = w1[:D].astype(cdt)                                     # (D, H)
    w2c = w2.astype(cdt)
    w3c = w3.astype(cdt)
    b2r = b2.reshape(1, H).astype(jnp.float32)
    b3r = b3.reshape(C, 1).astype(jnp.float32)

    tile_s = S if S <= max_rows_per_tile else max_rows_per_tile
    grid = (B, pl.cdiv(S, tile_s))

    out = pl.pallas_call(
        _mlp_kernel,
        out_shape=jax.ShapeDtypeStruct((B, C, S), jnp.float32),
        grid_spec=pltpu.PrefetchScalarGridSpec(
            num_scalar_prefetch=0,
            grid=grid,
            in_specs=[
                pl.BlockSpec((1, tile_s, D), lambda b, s: (b, s, 0)),  # temperature
                pl.BlockSpec((1, 1, H), lambda b, s: (b, 0, 0)),       # c1 (per batch)
                pl.BlockSpec((D, H), lambda b, s: (0, 0)),             # w1 (temp part)
                pl.BlockSpec((H, H), lambda b, s: (0, 0)),             # w2
                pl.BlockSpec((1, H), lambda b, s: (0, 0)),             # b2
                pl.BlockSpec((H, C), lambda b, s: (0, 0)),             # w3
                pl.BlockSpec((C, 1), lambda b, s: (0, 0)),             # b3
            ],
            out_specs=pl.BlockSpec((1, C, tile_s), lambda b, s: (b, 0, s)),
        ),
        compiler_params=pltpu.CompilerParams(
            dimension_semantics=("parallel", "parallel")),
    )(temperature, c1, w1_ts, w2c, b2r, w3c, b3r)

    if C == 1:
        return out[:, 0, :]            # (B, S)  == units.squeeze(dim=1)
    return out                         # (B, C, S)


def init_params(key, num_daily_measurements=24, hidden_size=32, num_out_channels=1):
    """Synthetic init matching the Conv2d weight shapes of DegreeDaysDNN_Coord
    (conv weights (out, 1, 1, k) are stored as dense (k, out))."""
    D3 = num_daily_measurements + 3
    ks = jax.random.split(key, 6)

    def u(k, shape, fan_in):
        bound = 1.0 / jnp.sqrt(fan_in)
        return jax.random.uniform(k, shape, jnp.float32, -bound, bound)

    return {
        "w1": u(ks[0], (D3, hidden_size), D3),
        "b1": u(ks[1], (hidden_size,), D3),
        "w2": u(ks[2], (hidden_size, hidden_size), hidden_size),
        "b2": u(ks[3], (hidden_size,), hidden_size),
        "w3": u(ks[4], (hidden_size, num_out_channels), hidden_size),
        "b3": u(ks[5], (num_out_channels,), hidden_size),
    }


def _reference(temperature, lat, lon, alt, params):
    B, S, _ = temperature.shape
    lats = jnp.broadcast_to(lat.reshape(B, 1), (B, S))[..., None]
    lons = jnp.broadcast_to(lon.reshape(B, 1), (B, S))[..., None]
    alts = jnp.broadcast_to(alt.reshape(B, 1), (B, S))[..., None]
    x = jnp.concatenate([temperature, lats, lons, alts], axis=-1)
    h1 = jax.nn.relu(x @ params["w1"] + params["b1"])
    h2 = jax.nn.relu(h1 @ params["w2"] + params["b2"])
    y = jax.nn.sigmoid(h2 @ params["w3"] + params["b3"])
    if params["w3"].shape[1] == 1:
        return y[..., 0]                    # (B, S)
    return jnp.transpose(y, (0, 2, 1))      # (B, C, S)


if __name__ == "__main__":
    key = jax.random.PRNGKey(0)
    k_t, k_lat, k_lon, k_alt, k_w1, k_w2 = jax.random.split(key, 6)

    B, S, D = 2, 16, 24          # batch, sequence (days), daily measurements
    hidden = 32                  # module default hidden_size

    temperature = jax.random.normal(k_t, (B, S, D), jnp.float32) * 10.0 + 15.0
    lat = jax.random.uniform(k_lat, (B,), jnp.float32, -60.0, 60.0)
    lon = jax.random.uniform(k_lon, (B,), jnp.float32, -180.0, 180.0)
    alt = jax.random.uniform(k_alt, (B,), jnp.float32, 0.0, 2.0)

    # ---- C == 1 (module default), f32 operands: tight check -----------------
    params1 = init_params(k_w1, num_daily_measurements=D,
                          hidden_size=hidden, num_out_channels=1)
    out1 = degree_days_dnn_coord_forward(temperature, lat, lon, alt, params1)
    out1 = jax.block_until_ready(out1)
    assert out1.shape == (B, S), out1.shape
    ref1 = _reference(temperature, lat, lon, alt, params1)
    err1 = float(jnp.abs(out1 - ref1).max())
    assert err1 < 5e-5, err1

    # ---- C > 1 path (output stays (B, C, S)) ---------------------------------
    params3 = init_params(k_w2, num_daily_measurements=D,
                          hidden_size=hidden, num_out_channels=3)
    out3 = degree_days_dnn_coord_forward(temperature, lat, lon, alt, params3)
    out3 = jax.block_until_ready(out3)
    assert out3.shape == (B, 3, S), out3.shape
    ref3 = _reference(temperature, lat, lon, alt, params3)
    err3 = float(jnp.abs(out3 - ref3).max())
    assert err3 < 5e-5, err3

    # ---- bf16 MXU-operand path (v6e/v7x oriented), loose tolerance -----------
    out_bf = degree_days_dnn_coord_forward(temperature, lat, lon, alt, params1,
                                           matmul_dtype=jnp.bfloat16)
    out_bf = jax.block_until_ready(out_bf)
    assert out_bf.shape == (B, S), out_bf.shape
    err_bf = float(jnp.abs(out_bf - ref1).max())
    assert err_bf < 1e-1, err_bf

    print("KERNEL_OK")
</pallas_src>

<mosaic_0001>
module attributes {stable_mosaic.version = 11 : i64} {
  func.func @_mlp_kernel(%arg0: i32, %arg1: i32, %arg2: memref<1x16x24xf32, #tpu.memory_space<vmem>>, %arg3: memref<1x1x32xf32, #tpu.memory_space<vmem>>, %arg4: memref<24x32xf32, #tpu.memory_space<vmem>>, %arg5: memref<32x32xf32, #tpu.memory_space<vmem>>, %arg6: memref<1x32xf32, #tpu.memory_space<vmem>>, %arg7: memref<32x1xf32, #tpu.memory_space<vmem>>, %arg8: memref<1x1xf32, #tpu.memory_space<vmem>>, %arg9: memref<1x1x16xf32, #tpu.memory_space<vmem>>) attributes {dimension_semantics = [#tpu.dimension_semantics<parallel>, #tpu.dimension_semantics<parallel>], iteration_bounds = array<i64: 2, 1>, scalar_prefetch = 0 : i64, scratch_operands = 0 : i64, tpu.core_type = #tpu.core_type<tc>, window_params = [{transform_indices = @transform_0, window_bounds = array<i64: 1, 16, 24>}, {transform_indices = @transform_1, window_bounds = array<i64: 1, 1, 32>}, {pipeline_mode = #tpu.pipeline_mode<synchronous>, transform_indices = @transform_2, window_bounds = array<i64: 24, 32>}, {pipeline_mode = #tpu.pipeline_mode<synchronous>, transform_indices = @transform_3, window_bounds = array<i64: 32, 32>}, {pipeline_mode = #tpu.pipeline_mode<synchronous>, transform_indices = @transform_4, window_bounds = array<i64: 1, 32>}, {pipeline_mode = #tpu.pipeline_mode<synchronous>, transform_indices = @transform_5, window_bounds = array<i64: 32, 1>}, {pipeline_mode = #tpu.pipeline_mode<synchronous>, transform_indices = @transform_6, window_bounds = array<i64: 1, 1>}, {transform_indices = @transform_7, window_bounds = array<i64: 1, 1, 16>}]} {
    %c0 = arith.constant 0 : index
    %c0_0 = arith.constant 0 : index
    %c0_1 = arith.constant 0 : index
    %0 = vector.load %arg2[%c0, %c0_0, %c0_1] : memref<1x16x24xf32, #tpu.memory_space<vmem>>, vector<1x16x24xf32>
    %1 = vector.shape_cast %0 : vector<1x16x24xf32> to vector<16x24xf32>
    %c0_2 = arith.constant 0 : index
    %c0_3 = arith.constant 0 : index
    %2 = vector.load %arg4[%c0_2, %c0_3] : memref<24x32xf32, #tpu.memory_space<vmem>>, vector<24x32xf32>
    %cst = arith.constant dense<0.000000e+00> : vector<16x32xf32>
    %3 = tpu.matmul %1, %2, %cst {dimension_numbers = #tpu.dot_dimension_numbers<[1], [0], [0], [1], [0, 0, 1, 1], [], []>} : vector<16x24xf32>, vector<24x32xf32>, vector<16x32xf32> -> vector<16x32xf32>
    %c0_4 = arith.constant 0 : index
    %c0_5 = arith.constant 0 : index
    %c0_6 = arith.constant 0 : index
    %4 = vector.load %arg3[%c0_4, %c0_5, %c0_6] : memref<1x1x32xf32, #tpu.memory_space<vmem>>, vector<1x1x32xf32>
    %5 = vector.shape_cast %4 : vector<1x1x32xf32> to vector<1x32xf32>
    %6 = vector.broadcast %5 : vector<1x32xf32> to vector<16x32xf32>
    %7 = arith.addf %3, %6 : vector<16x32xf32>
    %cst_7 = arith.constant 0.000000e+00 : f32
    %8 = vector.broadcast %cst_7 : f32 to vector<16x32xf32>
    %9 = arith.maximumf %7, %8 : vector<16x32xf32>
    %c0_8 = arith.constant 0 : index
    %c0_9 = arith.constant 0 : index
    %10 = vector.load %arg5[%c0_8, %c0_9] : memref<32x32xf32, #tpu.memory_space<vmem>>, vector<32x32xf32>
    %cst_10 = arith.constant dense<0.000000e+00> : vector<16x32xf32>
    %11 = tpu.matmul %9, %10, %cst_10 {dimension_numbers = #tpu.dot_dimension_numbers<[1], [0], [0], [1], [0, 0, 1, 1], [], []>} : vector<16x32xf32>, vector<32x32xf32>, vector<16x32xf32> -> vector<16x32xf32>
    %c0_11 = arith.constant 0 : index
    %c0_12 = arith.constant 0 : index
    %12 = vector.load %arg6[%c0_11, %c0_12] : memref<1x32xf32, #tpu.memory_space<vmem>>, vector<1x32xf32>
    %13 = vector.broadcast %12 : vector<1x32xf32> to vector<16x32xf32>
    %14 = arith.addf %11, %13 : vector<16x32xf32>
    %cst_13 = arith.constant 0.000000e+00 : f32
    %15 = vector.broadcast %cst_13 : f32 to vector<16x32xf32>
    %16 = arith.maximumf %14, %15 : vector<16x32xf32>
    %17 = tpu.transpose %16, [1, 0] : vector<16x32xf32> -> vector<32x16xf32>
    %c0_14 = arith.constant 0 : index
    %c0_15 = arith.constant 0 : index
    %18 = vector.load %arg7[%c0_14, %c0_15] : memref<32x1xf32, #tpu.memory_space<vmem>>, vector<32x1xf32>
    %19 = vector.broadcast %18 : vector<32x1xf32> to vector<32x16xf32>
    %20 = arith.mulf %17, %19 : vector<32x16xf32>
    %cst_16 = arith.constant dense<0.000000e+00> : vector<16xf32>
    %21 = vector.multi_reduction <add>, %20, %cst_16 [0] : vector<32x16xf32> to vector<16xf32>
    %22 = vector.shape_cast %21 : vector<16xf32> to vector<1x16xf32>
    %c0_17 = arith.constant 0 : index
    %c0_18 = arith.constant 0 : index
    %23 = vector.load %arg8[%c0_17, %c0_18] : memref<1x1xf32, #tpu.memory_space<vmem>>, vector<1x1xf32>
    %24 = vector.broadcast %23 : vector<1x1xf32> to vector<1x16xf32>
    %25 = arith.addf %22, %24 : vector<1x16xf32>
    %26 = arith.negf %25 : vector<1x16xf32>
    %27 = math.exp %26 : vector<1x16xf32>
    %cst_19 = arith.constant 1.000000e+00 : f32
    %28 = vector.broadcast %cst_19 : f32 to vector<1x16xf32>
    %29 = arith.addf %28, %27 : vector<1x16xf32>
    %30 = arith.divf %28, %29 : vector<1x16xf32>
    %c0_20 = arith.constant 0 : index
    %c0_21 = arith.constant 0 : index
    %c0_22 = arith.constant 0 : index
    %31 = vector.load %arg9[%c0_20, %c0_21, %c0_22] : memref<1x1x16xf32, #tpu.memory_space<vmem>>, vector<1x1x16xf32>
    %32 = vector.shape_cast %31 : vector<1x1x16xf32> to vector<1x16xf32>
    %33 = vector.shape_cast %30 : vector<1x16xf32> to vector<1x1x16xf32>
    tpu.vector_store %arg9[%c0_20, %c0_21, %c0_22], %33 {strides = array<i32>} : memref<1x1x16xf32, #tpu.memory_space<vmem>>, vector<1x1x16xf32>,
    return
  }
  func.func @transform_0(%arg0: i32, %arg1: i32) -> (i32, i32, i32) {
    %c0_i32 = arith.constant 0 : i32
    %c0_i32_0 = arith.constant 0 : i32
    return %arg0, %arg1, %c0_i32 : i32, i32, i32
  }
  func.func @transform_1(%arg0: i32, %arg1: i32) -> (i32, i32, i32) {
    %c0_i32 = arith.constant 0 : i32
    %c0_i32_0 = arith.constant 0 : i32
    %c0_i32_1 = arith.constant 0 : i32
    return %arg0, %c0_i32, %c0_i32_0 : i32, i32, i32
  }
  func.func @transform_2(%arg0: i32, %arg1: i32) -> (i32, i32) {
    %c0_i32 = arith.constant 0 : i32
    %c0_i32_0 = arith.constant 0 : i32
    %c0_i32_1 = arith.constant 0 : i32
    return %c0_i32, %c0_i32_0 : i32, i32
  }
  func.func @transform_3(%arg0: i32, %arg1: i32) -> (i32, i32) {
    %c0_i32 = arith.constant 0 : i32
    %c0_i32_0 = arith.constant 0 : i32
    %c0_i32_1 = arith.constant 0 : i32
    return %c0_i32, %c0_i32_0 : i32, i32
  }
  func.func @transform_4(%arg0: i32, %arg1: i32) -> (i32, i32) {
    %c0_i32 = arith.constant 0 : i32
    %c0_i32_0 = arith.constant 0 : i32
    %c0_i32_1 = arith.constant 0 : i32
    return %c0_i32, %c0_i32_0 : i32, i32
  }
  func.func @transform_5(%arg0: i32, %arg1: i32) -> (i32, i32) {
    %c0_i32 = arith.constant 0 : i32
    %c0_i32_0 = arith.constant 0 : i32
    %c0_i32_1 = arith.constant 0 : i32
    return %c0_i32, %c0_i32_0 : i32, i32
  }
  func.func @transform_6(%arg0: i32, %arg1: i32) -> (i32, i32) {
    %c0_i32 = arith.constant 0 : i32
    %c0_i32_0 = arith.constant 0 : i32
    %c0_i32_1 = arith.constant 0 : i32
    return %c0_i32, %c0_i32_0 : i32, i32
  }
  func.func @transform_7(%arg0: i32, %arg1: i32) -> (i32, i32, i32) {
    %c0_i32 = arith.constant 0 : i32
    %c0_i32_0 = arith.constant 0 : i32
    return %arg0, %c0_i32, %arg1 : i32, i32, i32
  }
}

</mosaic_0001>

<llo_original>
// kernel: degree_days_dnn_coord_forward.1
$region0: #{degree_days_dnn_coord_forward.1}
  #allocation0 [shape = 'u32[]', space=smem, size = 0x4, offset = 0x4, fixed_abs, tag = 'smem constant byte address 0x4 - core index']
  #allocation1 [shape = 'u32[144,128]{1,0:T(1,128)}', space=vmem, size = 0x12000, scoped, tag = 'internal scratch']
  #allocation2 [shape = 'f32[1,1]{1,0:T(1,128)S(1)}', space=vmem, size = 0x200, scoped, tag = 'scoped memory for degree_days_dnn_coord_forward.1']
  %s0 = inlined_call_operand.vmem [shape: f32[2,16,24], index: 0, kind: input, shape index: {}]
  %s1 = inlined_call_operand.vmem [shape: f32[2,1,32], index: 1, kind: input, shape index: {}]
  %s2 = inlined_call_operand.vmem [shape: f32[24,32], index: 2, kind: input, shape index: {}]
  %s3 = inlined_call_operand.vmem [shape: f32[32,32], index: 3, kind: input, shape index: {}]
  %s4 = inlined_call_operand.vmem [shape: f32[1,32], index: 4, kind: input, shape index: {}]
  %s5 = inlined_call_operand.vmem [shape: f32[32,1], index: 5, kind: input, shape index: {}]
  %s6 = inlined_call_operand.<no memory space> [shape: f32[1,1], index: 6, kind: input, shape index: {}]
  %s7 = inlined_call_operand.hbm [shape: f32[2,1,16], index: 7, kind: output, shape index: {}]
  %s8 = sld [smem:[#allocation0]]
  $region61: #{degree_days_dnn_coord_forward.1} parent=0
    _
  %s10 = ssub.s32 1, %s8
  %s11 = scalar_select 0, %s10, %s8
  %v12 = vstv %s6
  %13 = vst [vmem:[#allocation2] sm:$0x1] %v12
  $region1: #{degree_days_dnn_coord_forward.1} parent=0
    #allocation3 [shape = 'u8[1024]{0}', space=vmem, size = 0x400, scoped, tag = 'output window, operand 0']
    #allocation4 [shape = 's32[2]{0}', space=sflag, size = 0x8, scoped, tag = 'scoped memory for degree_days_dnn_coord_forward.1']
    %14 = vsyncpa [#allocation4], 0
    %s15 = scalar_lea.sflag [#allocation4], 1
    %16 = vsyncpa %s15, 0
    loop: start=0, step=1, limit=4
    $region2: #{degree_days_dnn_coord_forward.1} parent=1 // loop_pre_header
      _
    $region3: #{degree_days_dnn_coord_forward.1} parent=1 // loop_header
      %s18 = sphi 0, %s22
      %p19 = scmp.ge.s32.totalorder %s18, 4
      %s25 = sphi 0, %s37
      %s26 = sphi 0, %s33
      %s27 = sphi 0, %s25
      %s28 = sphi 0, %s26
      %s29 = sphi 0, %s27
      %s30 = sphi 0, %s28
      %s42 = sphi 0, %s44
      %s45 = sphi 0, %s42
      %s46 = sphi 0, %s45
      %s62 = sphi 0, %s46
      %s68 = sphi 0, %s70
      %s71 = sphi 0, %s68
      %s72 = sphi 0, %s71
      %s88 = sphi 0, %s72
      %s92 = sphi 0, %s92
      %s94 = sphi 0, %s92
      %s95 = sphi 0, %s94
      %s109 = sphi 0, %s95
      %s113 = sphi 0, %s113
      %s115 = sphi 0, %s113
      %s116 = sphi 0, %s115
      %s130 = sphi 0, %s116
      %s134 = sphi 0, %s134
      %s136 = sphi 0, %s134
      %s137 = sphi 0, %s136
      %s151 = sphi 0, %s137
      %s155 = sphi 0, %s155
      %s157 = sphi 0, %s155
      %s158 = sphi 0, %s157
      %s172 = sphi 0, %s158
      %s176 = sphi 0, %s176
      %s178 = sphi 0, %s176
      %s179 = sphi 0, %s178
      %s193 = sphi 0, %s179
      %s201 = sphi 0, %s203
      %s204 = sphi 0, %s201
      %s205 = sphi 0, %s204
      %s221 = sphi 0, %s205
    $region4: #{degree_days_dnn_coord_forward.1} parent=1 // loop_header_branch
      %21 = sbr.rel (%p19) target = $region8
    $region5: #{degree_days_dnn_coord_forward.1} parent=1 // loop_body
      %s23 = ssub.s32 %s18, 1
      %s24 = ssub.s32 %s18, 2
      %s31 = sadd.s32 1, %s26
      %p32 = scmp.ge.s32.totalorder %s31, 1
      %s33 = scalar_select %p32, 0, %s31
      %s34 = sadd.s32 1, %s25
      %s35 = scalar_select %p32, %s34, %s25
      %p36 = scmp.ge.s32.totalorder %s35, 2
      %s37 = scalar_select %p36, 0, %s35
      %s38 = ssub.s32 %s25, %s37
      %s39 = ssub.s32 %s26, %s33
      %s40 = sor.u32 %s38, %s39
      %p41 = scmp.eq.s32.totalorder %s40, 0
      %s43 = sadd.s32 %s42, 1
      %s44 = scalar_select %p41, %s42, %s43
      %p47 = pneg %p41
      %p48 = scmp.eq.s32.totalorder %s18, 1
      %p49 = por %p47, %p48
      %p50 = scmp.ne.s32.totalorder %s42, %s45
      %p51 = scmp.eq.s32.totalorder %s18, 0
      %p52 = por %p50, %p51
      %p53 = scmp.ne.s32.totalorder %s42, %s45
      %p54 = scmp.eq.s32.totalorder %s23, 1
      %p55 = por %p53, %p54
      %p56 = scmp.ne.s32.totalorder %s45, %s46
      %p57 = scmp.eq.s32.totalorder %s23, 0
      %p58 = por %p56, %p57
      %p59 = scmp.ne.s32.totalorder %s45, %s46
      %p60 = scmp.eq.s32.totalorder %s24, 1
      %p61 = por %p59, %p60
      %p63 = scmp.ne.s32.totalorder %s46, %s62
      %p64 = scmp.eq.s32.totalorder %s24, 0
      %p65 = por %p63, %p64
      %s66 = ssub.s32 %s25, %s37
      %p67 = scmp.eq.s32.totalorder %s66, 0
      %s69 = sadd.s32 %s68, 1
      %s70 = scalar_select %p67, %s68, %s69
      %p73 = pneg %p67
      %p74 = scmp.eq.s32.totalorder %s18, 1
      %p75 = por %p73, %p74
      %p76 = scmp.ne.s32.totalorder %s68, %s71
      %p77 = scmp.eq.s32.totalorder %s18, 0
      %p78 = por %p76, %p77
      %p79 = scmp.ne.s32.totalorder %s68, %s71
      %p80 = scmp.eq.s32.totalorder %s23, 1
      %p81 = por %p79, %p80
      %p82 = scmp.ne.s32.totalorder %s71, %s72
      %p83 = scmp.eq.s32.totalorder %s23, 0
      %p84 = por %p82, %p83
      %p85 = scmp.ne.s32.totalorder %s71, %s72
      %p86 = scmp.eq.s32.totalorder %s24, 1
      %p87 = por %p85, %p86
      %p89 = scmp.ne.s32.totalorder %s72, %s88
      %p90 = scmp.eq.s32.totalorder %s24, 0
      %p91 = por %p89, %p90
      %s93 = sadd.s32 %s92, 1
      %p96 = scmp.eq.s32.totalorder %s18, 1
      %p97 = scmp.ne.s32.totalorder %s92, %s94
      %p98 = scmp.eq.s32.totalorder %s18, 0
      %p99 = por %p97, %p98
      %p100 = scmp.ne.s32.totalorder %s92, %s94
      %p101 = scmp.eq.s32.totalorder %s23, 1
      %p102 = por %p100, %p101
      %p103 = scmp.ne.s32.totalorder %s94, %s95
      %p104 = scmp.eq.s32.totalorder %s23, 0
      %p105 = por %p103, %p104
      %p106 = scmp.ne.s32.totalorder %s94, %s95
      %p107 = scmp.eq.s32.totalorder %s24, 1
      %p108 = por %p106, %p107
      %p110 = scmp.ne.s32.totalorder %s95, %s109
      %p111 = scmp.eq.s32.totalorder %s24, 0
      %p112 = por %p110, %p111
      %s114 = sadd.s32 %s113, 1
      %p117 = scmp.eq.s32.totalorder %s18, 1
      %p118 = scmp.ne.s32.totalorder %s113, %s115
      %p119 = scmp.eq.s32.totalorder %s18, 0
      %p120 = por %p118, %p119
      %p121 = scmp.ne.s32.totalorder %s113, %s115
      %p122 = scmp.eq.s32.totalorder %s23, 1
      %p123 = por %p121, %p122
      %p124 = scmp.ne.s32.totalorder %s115, %s116
      %p125 = scmp.eq.s32.totalorder %s23, 0
      %p126 = por %p124, %p125
      %p127 = scmp.ne.s32.totalorder %s115, %s116
      %p128 = scmp.eq.s32.totalorder %s24, 1
      %p129 = por %p127, %p128
      %p131 = scmp.ne.s32.totalorder %s116, %s130
      %p132 = scmp.eq.s32.totalorder %s24, 0
      %p133 = por %p131, %p132
      %s135 = sadd.s32 %s134, 1
      %p138 = scmp.eq.s32.totalorder %s18, 1
      %p139 = scmp.ne.s32.totalorder %s134, %s136
      %p140 = scmp.eq.s32.totalorder %s18, 0
      %p141 = por %p139, %p140
      %p142 = scmp.ne.s32.totalorder %s134, %s136
      %p143 = scmp.eq.s32.totalorder %s23, 1
      %p144 = por %p142, %p143
      %p145 = scmp.ne.s32.totalorder %s136, %s137
      %p146 = scmp.eq.s32.totalorder %s23, 0
      %p147 = por %p145, %p146
      %p148 = scmp.ne.s32.totalorder %s136, %s137
      %p149 = scmp.eq.s32.totalorder %s24, 1
      %p150 = por %p148, %p149
      %p152 = scmp.ne.s32.totalorder %s137, %s151
      %p153 = scmp.eq.s32.totalorder %s24, 0
      %p154 = por %p152, %p153
      %s156 = sadd.s32 %s155, 1
      %p159 = scmp.eq.s32.totalorder %s18, 1
      %p160 = scmp.ne.s32.totalorder %s155, %s157
      %p161 = scmp.eq.s32.totalorder %s18, 0
      %p162 = por %p160, %p161
      %p163 = scmp.ne.s32.totalorder %s155, %s157
      %p164 = scmp.eq.s32.totalorder %s23, 1
      %p165 = por %p163, %p164
      %p166 = scmp.ne.s32.totalorder %s157, %s158
      %p167 = scmp.eq.s32.totalorder %s23, 0
      %p168 = por %p166, %p167
      %p169 = scmp.ne.s32.totalorder %s157, %s158
      %p170 = scmp.eq.s32.totalorder %s24, 1
      %p171 = por %p169, %p170
      %p173 = scmp.ne.s32.totalorder %s158, %s172
      %p174 = scmp.eq.s32.totalorder %s24, 0
      %p175 = por %p173, %p174
      %s177 = sadd.s32 %s176, 1
      %p180 = scmp.eq.s32.totalorder %s18, 1
      %p181 = scmp.ne.s32.totalorder %s176, %s178
      %p182 = scmp.eq.s32.totalorder %s18, 0
      %p183 = por %p181, %p182
      %p184 = scmp.ne.s32.totalorder %s176, %s178
      %p185 = scmp.eq.s32.totalorder %s23, 1
      %p186 = por %p184, %p185
      %p187 = scmp.ne.s32.totalorder %s178, %s179
      %p188 = scmp.eq.s32.totalorder %s23, 0
      %p189 = por %p187, %p188
      %p190 = scmp.ne.s32.totalorder %s178, %s179
      %p191 = scmp.eq.s32.totalorder %s24, 1
      %p192 = por %p190, %p191
      %p194 = scmp.ne.s32.totalorder %s179, %s193
      %p195 = scmp.eq.s32.totalorder %s24, 0
      %p196 = por %p194, %p195
      %s197 = ssub.s32 %s25, %s37
      %s198 = ssub.s32 %s26, %s33
      %s199 = sor.u32 %s197, %s198
      %p200 = scmp.eq.s32.totalorder %s199, 0
      %s202 = sadd.s32 %s201, 1
      %s203 = scalar_select %p200, %s201, %s202
      %p206 = pneg %p200
      %p207 = scmp.eq.s32.totalorder %s18, 1
      %p208 = por %p206, %p207
      %p209 = scmp.ne.s32.totalorder %s201, %s204
      %p210 = scmp.eq.s32.totalorder %s18, 0
      %p211 = por %p209, %p210
      %p212 = scmp.ne.s32.totalorder %s201, %s204
      %p213 = scmp.eq.s32.totalorder %s23, 1
      %p214 = por %p212, %p213
      %p215 = scmp.ne.s32.totalorder %s204, %s205
      %p216 = scmp.eq.s32.totalorder %s23, 0
      %p217 = por %p215, %p216
      %p218 = scmp.ne.s32.totalorder %s204, %s205
      %p219 = scmp.eq.s32.totalorder %s24, 1
      %p220 = por %p218, %p219
      %p222 = scmp.ne.s32.totalorder %s205, %s221
      %p223 = scmp.eq.s32.totalorder %s24, 0
      %p224 = por %p222, %p223
      %p225 = scmp.le.s32.totalorder 1, %s18
      %p226 = scmp.lt.s32.totalorder %s18, 3
      %p227 = pnand %p225, %p226
      %p228 = pneg %p227
      // Predicated region
      $region9: #{degree_days_dnn_coord_forward.1} parent=5 // pred_check
        _
      $region10: #{degree_days_dnn_coord_forward.1} parent=5 // pred_check_branch
        %230 = sbr.rel (%p227) target = $region12
      $region11: #{degree_days_dnn_coord_forward.1} parent=5 // pred_region
        %s231 = ssub.s32 %s18, 1
        // Predicated region
        $region13: #{degree_days_dnn_coord_forward.1} parent=11 // pred_check
          %p232 = pneg %p105
        $region14: #{degree_days_dnn_coord_forward.1} parent=11 // pred_check_branch
          %234 = sbr.rel (%p232) target = $region16
        $region15: #{degree_days_dnn_coord_forward.1} parent=11 // pred_region
          _
        $region16: #{degree_days_dnn_coord_forward.1} parent=11 // pred_fallthru
          _
        // Predicated region
        $region17: #{degree_days_dnn_coord_forward.1} parent=11 // pred_check
          %p235 = pneg %p126
        $region18: #{degree_days_dnn_coord_forward.1} parent=11 // pred_check_branch
          %237 = sbr.rel (%p235) target = $region20
        $region19: #{degree_days_dnn_coord_forward.1} parent=11 // pred_region
          _
        $region20: #{degree_days_dnn_coord_forward.1} parent=11 // pred_fallthru
          _
        // Predicated region
        $region21: #{degree_days_dnn_coord_forward.1} parent=11 // pred_check
          %p238 = pneg %p147
        $region22: #{degree_days_dnn_coord_forward.1} parent=11 // pred_check_branch
          %240 = sbr.rel (%p238) target = $region24
        $region23: #{degree_days_dnn_coord_forward.1} parent=11 // pred_region
          _
        $region24: #{degree_days_dnn_coord_forward.1} parent=11 // pred_fallthru
          _
        // Predicated region
        $region25: #{degree_days_dnn_coord_forward.1} parent=11 // pred_check
          %p241 = pneg %p168
        $region26: #{degree_days_dnn_coord_forward.1} parent=11 // pred_check_branch
          %243 = sbr.rel (%p241) target = $region28
        $region27: #{degree_days_dnn_coord_forward.1} parent=11 // pred_region
          _
        $region28: #{degree_days_dnn_coord_forward.1} parent=11 // pred_fallthru
          _
        // Predicated region
        $region29: #{degree_days_dnn_coord_forward.1} parent=11 // pred_check
          %p244 = pneg %p189
        $region30: #{degree_days_dnn_coord_forward.1} parent=11 // pred_check_branch
          %246 = sbr.rel (%p244) target = $region32
        $region31: #{degree_days_dnn_coord_forward.1} parent=11 // pred_region
          _
        $region32: #{degree_days_dnn_coord_forward.1} parent=11 // pred_fallthru
          _
      $region12: #{degree_days_dnn_coord_forward.1} parent=5 // pred_fallthru
        _
      %p247 = scmp.lt.s32.totalorder %s18, 2
      // Predicated region
      $region33: #{degree_days_dnn_coord_forward.1} parent=5 // pred_check
        %p248 = pneg %p247
      $region34: #{degree_days_dnn_coord_forward.1} parent=5 // pred_check_branch
        %250 = sbr.rel (%p248) target = $region36
      $region35: #{degree_days_dnn_coord_forward.1} parent=5 // pred_region
        // Predicated region
        $region37: #{degree_days_dnn_coord_forward.1} parent=35 // pred_check
          %p251 = pneg %p52
        $region38: #{degree_days_dnn_coord_forward.1} parent=35 // pred_check_branch
          %253 = sbr.rel (%p251) target = $region40
        $region39: #{degree_days_dnn_coord_forward.1} parent=35 // pred_region
          %s254 = smul.u32 2, %s26
          %p255 = scmp.lt.s32.totalorder %s25, 1
          %s256 = scalar_select %p255, %s25, 1
          %p257 = scmp.lt.s32.totalorder %s254, 1
          %s258 = scalar_select %p257, %s254, 1
          %s259 = smul.addr %s256, 2
          %s260 = sadd.s32 %s258, %s259
          %s261 = smul.addr %s260, 8
          %s262 = scalar_lea.vmem %s0, %s261
          %s263 = smul.u32 2, %s26
        $region40: #{degree_days_dnn_coord_forward.1} parent=35 // pred_fallthru
          _
        // Predicated region
        $region41: #{degree_days_dnn_coord_forward.1} parent=35 // pred_check
          %p264 = pneg %p78
        $region42: #{degree_days_dnn_coord_forward.1} parent=35 // pred_check_branch
          %266 = sbr.rel (%p264) target = $region44
        $region43: #{degree_days_dnn_coord_forward.1} parent=35 // pred_region
          %p267 = scmp.lt.s32.totalorder %s25, 1
          %s268 = scalar_select %p267, %s25, 1
          %s269 = scalar_lea.vmem %s1, %s268
        $region44: #{degree_days_dnn_coord_forward.1} parent=35 // pred_fallthru
          _
      $region36: #{degree_days_dnn_coord_forward.1} parent=5 // pred_fallthru
        _
      %p270 = scmp.le.s32.totalorder 1, %s18
      %p271 = scmp.lt.s32.totalorder %s18, 3
      %p272 = pnand %p270, %p271
      %p273 = pneg %p272
      // Predicated region
      $region45: #{degree_days_dnn_coord_forward.1} parent=5 // pred_check
        _
      $region46: #{degree_days_dnn_coord_forward.1} parent=5 // pred_check_branch
        %275 = sbr.rel (%p272) target = $region48
      $region47: #{degree_days_dnn_coord_forward.1} parent=5 // pred_region
        %s276 = ssub.s32 %s18, 1
        %s277 = smul.u32 2, %s28
        %p278 = scmp.lt.s32.totalorder %s27, 1
        %s279 = scalar_select %p278, %s27, 1
        %p280 = scmp.lt.s32.totalorder %s277, 1
        %s281 = scalar_select %p280, %s277, 1
        %s282 = smul.addr %s279, 2
        %s283 = sadd.s32 %s281, %s282
        %s284 = smul.addr %s283, 8
        %s285 = scalar_lea.vmem %s0, %s284
        %p286 = pneg %p58
        %p287 = pneg %p55
        %p288 = scmp.lt.s32.totalorder %s27, 1
        %s289 = scalar_select %p288, %s27, 1
        %s290 = scalar_lea.vmem %s1, %s289
        %p291 = pneg %p84
        %p292 = pneg %p81
        %p293 = pneg %p105
        %p294 = pneg %p102
        %p295 = pneg %p126
        %p296 = pneg %p123
        %p297 = pneg %p147
        %p298 = pneg %p144
        %p299 = pneg %p168
        %p300 = pneg %p165
        %p301 = pneg %p189
        %p302 = pneg %p186
        %p303 = pneg %p217
        %p304 = pneg %p214
        %s305 = sand.u32 %s204, 1
        %s306 = scalar_lea.sflag [#allocation4], %s305
        %s307 = sand.u32 %s204, 1
        %s308 = scalar_lea.vmem [#allocation3], %s307
        %s309 = smul.u32 2, %s28
        %p310 = scmp.lt.s32.totalorder %s27, 1
        %s311 = scalar_select %p310, %s27, 1
        %p312 = scmp.lt.s32.totalorder %s309, 1
        %s313 = scalar_select %p312, %s309, 1
        %s314 = smul.addr %s311, 2
        %s315 = sadd.s32 %s313, %s314
        %s316 = smul.addr %s315, 8
        %s317 = scalar_lea.vmem %s0, %s316
        %s318 = smul.u32 2, %s28
        %p319 = scmp.lt.s32.totalorder %s27, 1
        %s320 = scalar_select %p319, %s27, 1
        %s321 = scalar_lea.vmem %s1, %s320
        %v322 = vld [vmem:[%s317] sm:$0xff]
        %v323 = vld [vmem:[%s317 + $0x8] sm:$0xff]
        %v324 = vld [vmem:[%s2] sm:$0xff]
        %v325 = vld [vmem:[%s2 + $0x8] sm:$0xff]
        %v326 = vld [vmem:[%s2 + $0x10] sm:$0xff]
        %v327 = vld [vmem:[%s321] sm:$0x1]
        %v329 = vlaneseq
        %v330 = vshrl.u32 %v329, 7
        %v331 = vsub.s32 0, %v330
        %v332 = vrot.slane %v327, %v331
        %vm334 = vcmask 195584
        %v336 = vsel %vm334, %v322, 0
        %v339 = vsel %vm334, %v323, 0
        %341 = vmatprep.subr.mxu0 0.0
        %342 = vmatpush1.msra.mxu0 0.0
        %343 = vmatprep.subr.mxu0 0.0
        %344 = vmatpush1.msra.mxu0 0.0
        %345 = vmatprep.subr.mxu0 0.0
        %346 = vmatpush1.msra.mxu0 0.0
        %347 = vmatprep.subr.mxu0 0.0
        %348 = vmatpush1.msra.mxu0 0.0
        %349 = vmatprep.subr.mxu0 0.0
        %350 = vmatpush1.msra.mxu0 0.0
        %351 = vmatprep.subr.mxu0 0.0
        %352 = vmatpush1.msra.mxu0 0.0
        %353 = vmatprep.subr.mxu0 0.0
        %354 = vmatpush1.msra.mxu0 0.0
        %355 = vmatprep.subr.mxu0 0.0
        %356 = vmatpush1.msra.mxu0 0.0
        %357 = vmatprep.subr.mxu0 0.0
        %358 = vmatpush1.msra.mxu0 0.0
        %359 = vmatprep.subr.mxu0 0.0
        %360 = vmatpush1.msra.mxu0 0.0
        %361 = vmatprep.subr.mxu0 0.0
        %362 = vmatpush1.msra.mxu0 0.0
        %363 = vmatprep.subr.mxu0 0.0
        %364 = vmatpush1.msra.mxu0 0.0
        %365 = vmatprep.subr.mxu0 0.0
        %366 = vmatpush1.msra.mxu0 0.0
        %367 = vmatprep.subr.mxu0 0.0
        %368 = vmatpush1.msra.mxu0 %v326
        %369 = vmatprep.subr.mxu0 0.0
        %370 = vmatpush1.msra.mxu0 %v325
        %371 = vmatprep.subr.mxu0 0.0
        %372 = vmatpush1.msra.mxu0 %v324
        %373 = vmatprep.subr.mxu0 0.0
        %374 = vmatpush2.msra.mxu0 0.0
        %375 = vmatprep.subr.mxu0 0.0
        %376 = vmatpush2.msra.mxu0 0.0
        %377 = vmatprep.subr.mxu0 0.0
        %378 = vmatpush2.msra.mxu0 0.0
        %379 = vmatprep.subr.mxu0 0.0
        %380 = vmatpush2.msra.mxu0 0.0
        %381 = vmatprep.subr.mxu0 0.0
        %382 = vmatpush2.msra.mxu0 0.0
        %383 = vmatprep.subr.mxu0 0.0
        %384 = vmatpush2.msra.mxu0 0.0
        %385 = vmatprep.subr.mxu0 0.0
        %386 = vmatpush2.msra.mxu0 0.0
        %387 = vmatprep.subr.mxu0 0.0
        %388 = vmatpush2.msra.mxu0 0.0
        %389 = vmatprep.subr.mxu0 0.0
        %390 = vmatpush2.msra.mxu0 0.0
        %391 = vmatprep.subr.mxu0 0.0
        %392 = vmatpush2.msra.mxu0 0.0
        %393 = vmatprep.subr.mxu0 0.0
        %394 = vmatpush2.msra.mxu0 0.0
        %395 = vmatprep.subr.mxu0 0.0
        %396 = vmatpush2.msra.mxu0 0.0
        %397 = vmatprep.subr.mxu0 0.0
        %398 = vmatpush2.msra.mxu0 0.0
        %399 = vmatprep.subr.mxu0 0.0
        %400 = vmatpush2.msra.mxu0 0.0
        %401 = vmatprep.subr.mxu0 0.0
        %402 = vmatpush2.msra.mxu0 0.0
        %403 = vmatprep.subr.mxu0 0.0
        %404 = vmatpush2.msra.mxu0 0.0
        %405 = vmatprep.mubr.f32.mxu0 0.0
        %406 = vmatmul.mubr.f32.gmra.mxu0 %v336
        %v407 = vpop.f32.mrf.mxu0
        %v408 = vadd.f32 %v332, %v407
        %v409 = vpop.f32.mrf.mxu0
        %410 = vmatprep.mubr.f32.mxu0 0.0
        %411 = vmatmul.mubr.f32.gmra.mxu0 %v339
        %v412 = vpop.f32.mrf.mxu0
        %v413 = vadd.f32 %v332, %v412
        %v414 = vpop.f32.mrf.mxu0
        %415 = vdwg.mxu0
        %v416 = vmax.f32 %v408, 0.0
        %v417 = vmax.f32 %v413, 0.0
        %v418 = vld [vmem:[%s3] sm:$0xff]
        %v419 = vld [vmem:[%s3 + $0x8] sm:$0xff]
        %v420 = vld [vmem:[%s3 + $0x10] sm:$0xff]
        %v421 = vld [vmem:[%s3 + $0x18] sm:$0xff]
        %v422 = vld [vmem:[%s4] sm:$0x1]
        %v424 = vlaneseq
        %v425 = vshrl.u32 %v424, 7
        %v426 = vsub.s32 0, %v425
        %v427 = vrot.slane %v422, %v426
        %vm429 = vcmask 261120
        %v431 = vsel %vm429, %v416, 0
        %v434 = vsel %vm429, %v417, 0
        %436 = vmatprep.subr.mxu0 0.0
        %437 = vmatpush1.msra.mxu0 0.0
        %438 = vmatprep.subr.mxu0 0.0
        %439 = vmatpush1.msra.mxu0 0.0
        %440 = vmatprep.subr.mxu0 0.0
        %441 = vmatpush1.msra.mxu0 0.0
        %442 = vmatprep.subr.mxu0 0.0
        %443 = vmatpush1.msra.mxu0 0.0
        %444 = vmatprep.subr.mxu0 0.0
        %445 = vmatpush1.msra.mxu0 0.0
        %446 = vmatprep.subr.mxu0 0.0
        %447 = vmatpush1.msra.mxu0 0.0
        %448 = vmatprep.subr.mxu0 0.0
        %449 = vmatpush1.msra.mxu0 0.0
        %450 = vmatprep.subr.mxu0 0.0
        %451 = vmatpush1.msra.mxu0 0.0
        %452 = vmatprep.subr.mxu0 0.0
        %453 = vmatpush1.msra.mxu0 0.0
        %454 = vmatprep.subr.mxu0 0.0
        %455 = vmatpush1.msra.mxu0 0.0
        %456 = vmatprep.subr.mxu0 0.0
        %457 = vmatpush1.msra.mxu0 0.0
        %458 = vmatprep.subr.mxu0 0.0
        %459 = vmatpush1.msra.mxu0 0.0
        %460 = vmatprep.subr.mxu0 0.0
        %461 = vmatpush1.msra.mxu0 %v421
        %462 = vmatprep.subr.mxu0 0.0
        %463 = vmatpush1.msra.mxu0 %v420
        %464 = vmatprep.subr.mxu0 0.0
        %465 = vmatpush1.msra.mxu0 %v419
        %466 = vmatprep.subr.mxu0 0.0
        %467 = vmatpush1.msra.mxu0 %v418
        %468 = vmatprep.subr.mxu0 0.0
        %469 = vmatpush2.msra.mxu0 0.0
        %470 = vmatprep.subr.mxu0 0.0
        %471 = vmatpush2.msra.mxu0 0.0
        %472 = vmatprep.subr.mxu0 0.0
        %473 = vmatpush2.msra.mxu0 0.0
        %474 = vmatprep.subr.mxu0 0.0
        %475 = vmatpush2.msra.mxu0 0.0
        %476 = vmatprep.subr.mxu0 0.0
        %477 = vmatpush2.msra.mxu0 0.0
        %478 = vmatprep.subr.mxu0 0.0
        %479 = vmatpush2.msra.mxu0 0.0
        %480 = vmatprep.subr.mxu0 0.0
        %481 = vmatpush2.msra.mxu0 0.0
        %482 = vmatprep.subr.mxu0 0.0
        %483 = vmatpush2.msra.mxu0 0.0
        %484 = vmatprep.subr.mxu0 0.0
        %485 = vmatpush2.msra.mxu0 0.0
        %486 = vmatprep.subr.mxu0 0.0
        %487 = vmatpush2.msra.mxu0 0.0
        %488 = vmatprep.subr.mxu0 0.0
        %489 = vmatpush2.msra.mxu0 0.0
        %490 = vmatprep.subr.mxu0 0.0
        %491 = vmatpush2.msra.mxu0 0.0
        %492 = vmatprep.subr.mxu0 0.0
        %493 = vmatpush2.msra.mxu0 0.0
        %494 = vmatprep.subr.mxu0 0.0
        %495 = vmatpush2.msra.mxu0 0.0
        %496 = vmatprep.subr.mxu0 0.0
        %497 = vmatpush2.msra.mxu0 0.0
        %498 = vmatprep.subr.mxu0 0.0
        %499 = vmatpush2.msra.mxu0 0.0
        %500 = vmatprep.mubr.f32.mxu0 0.0
        %501 = vmatmul.mubr.f32.gmra.mxu0 %v431
        %v502 = vpop.f32.mrf.mxu0
        %v503 = vadd.f32 %v427, %v502
        %v504 = vpop.f32.mrf.mxu0
        %505 = vmatprep.mubr.f32.mxu0 0.0
        %506 = vmatmul.mubr.f32.gmra.mxu0 %v434
        %v507 = vpop.f32.mrf.mxu0
        %v508 = vadd.f32 %v427, %v507
        %v509 = vpop.f32.mrf.mxu0
        %510 = vdwg.mxu0
        %v511 = vmax.f32 %v503, 0.0
        %v512 = vmax.f32 %v508, 0.0
        %513 = vxpose.xlu0.b32.start [1/16] %v511, 128
        %514 = vxpose.xlu0.b32.cont [2/16] %v512, 128
        %515 = vxpose.xlu0.b32.cont [3/16] 0.0, 128
        %516 = vxpose.xlu0.b32.cont [4/16] 0.0, 128
        %517 = vxpose.xlu0.b32.cont [5/16] 0.0, 128
        %518 = vxpose.xlu0.b32.cont [6/16] 0.0, 128
        %519 = vxpose.xlu0.b32.cont [7/16] 0.0, 128
        %520 = vxpose.xlu0.b32.cont [8/16] 0.0, 128
        %521 = vxpose.xlu0.b32.cont [9/16] 0.0, 128
        %522 = vxpose.xlu0.b32.cont [10/16] 0.0, 128
        %523 = vxpose.xlu0.b32.cont [11/16] 0.0, 128
        %524 = vxpose.xlu0.b32.cont [12/16] 0.0, 128
        %525 = vxpose.xlu0.b32.cont [13/16] 0.0, 128
        %526 = vxpose.xlu0.b32.cont [14/16] 0.0, 128
        %527 = vxpose.xlu0.b32.cont [15/16] 0.0, 128
        %528 = vxpose.xlu0.b32.end [16/16] 0.0, 128
        %v529 = vpop.trf.xlu0
        %v530 = vpop.trf.xlu0
        %v531 = vpop.trf.xlu0
        %v532 = vpop.trf.xlu0
        %v533 = vpop.trf.xlu0
        %v534 = vpop.trf.xlu0
        %v535 = vpop.trf.xlu0
        %v536 = vpop.trf.xlu0
        %v537 = vpop.trf.xlu0
        %v538 = vpop.trf.xlu0
        %v539 = vpop.trf.xlu0
        %v540 = vpop.trf.xlu0
        %v541 = vpop.trf.xlu0
        %v542 = vpop.trf.xlu0
        %v543 = vpop.trf.xlu0
        %v544 = vpop.trf.xlu0
        %v545 = vld [vmem:[%s5] sm:$0xff]
        %v546 = vld [vmem:[%s5 + $0x8] sm:$0xff]
        %v547 = vld [vmem:[%s5 + $0x10] sm:$0xff]
        %v548 = vld [vmem:[%s5 + $0x18] sm:$0xff]
        %550 = vset.pattern.permute.xlu0 0
        %551 = vperm.xlu0 %550, %v545
        %v552 = vpop.permute.xlu0 %551
        %555 = vset.pattern.permute.xlu0 0
        %556 = vperm.xlu0 %555, %v546
        %v557 = vpop.permute.xlu0 %556
        %560 = vset.pattern.permute.xlu0 0
        %561 = vperm.xlu0 %560, %v547
        %v562 = vpop.permute.xlu0 %561
        %565 = vset.pattern.permute.xlu0 0
        %566 = vperm.xlu0 %565, %v548
        %v567 = vpop.permute.xlu0 %566
        %v569 = vmul.f32 %v529, %v552
        %v570 = vmul.f32 %v530, %v557
        %v571 = vmul.f32 %v531, %v562
        %v572 = vmul.f32 %v532, %v567
        %vm573 = vcmask 130048
        %v574 = vsel %vm573, %v569, 0.0
        %v575 = vsel %vm573, %v570, 0.0
        %v576 = vadd.f32 %v574, %v575
        %v577 = vsel %vm573, %v571, 0.0
        %v578 = vadd.f32 %v576, %v577
        %v579 = vsel %vm573, %v572, 0.0
        %v580 = vadd.f32 %v578, %v579
        %v581 = vrot.slane %v580, 4
        %v582 = vadd.f32 %v580, %v581
        %v583 = vrot.slane %v582, 2
        %v584 = vadd.f32 %v582, %v583
        %v585 = vrot.slane %v584, 1
        %v586 = vadd.f32 %v584, %v585
        %v587 = vld [vmem:[#allocation2] sm:$0x1]
        %589 = vset.pattern.permute.xlu0 0
        %590 = vperm.xlu0 %589, %v587
        %v591 = vpop.permute.xlu0 %590
        %v593 = vlaneseq
        %v594 = vshrl.u32 %v593, 7
        %v595 = vsub.s32 0, %v594
        %v596 = vrot.slane %v591, %v595
        %v597 = vadd.f32 %v586, %v596
        %v598 = vxor.u32 %v597, 2147483648
        %v599 = vmul.f32 %v598, 1.442695
        %v600 = vpow.pop %v599
        %v601 = vadd.f32 %v600, 1.0
        %v602 = vrcp.pop %v601
        %v603 = vmul.f32 1.0, %v602
        %vm604 = vcmask 122880
        %605 = vst.msk [vmem:[%s308] sm:$0x1] %vm604, %v603
        %s606 = sand.u32 %s204, 1
        %s607 = scalar_lea.sflag [#allocation4], %s606
        %s608 = sand.u32 %s204, 1
        %s609 = scalar_lea.vmem [#allocation3], %s608
        // Predicated region
        $region49: #{degree_days_dnn_coord_forward.1} parent=47 // pred_check
          %p610 = pneg %p214
        $region50: #{degree_days_dnn_coord_forward.1} parent=47 // pred_check_branch
          %612 = sbr.rel (%p610) target = $region52
        $region51: #{degree_days_dnn_coord_forward.1} parent=47 // pred_region
          %s614 = ssub.s32 16, 16
          %615 = vsyncadd %s607, %s614
          %s616 = sadd.s32 %s28, %s27
          %s617 = smul.addr %s616, 16
          %s618 = scalar_lea.hbm %s7, %s617
          %s620 = sshll.u32 %s609, 4
          %s621 = int_to_ptr.vmem [resolvable:$true] %s620
          %623 = dma.vmem_to_hbm [thread:$0]  %s621, 16, %s618, %s607
        $region52: #{degree_days_dnn_coord_forward.1} parent=47 // pred_fallthru
          _
      $region48: #{degree_days_dnn_coord_forward.1} parent=5 // pred_fallthru
        _
      %p624 = scmp.le.s32.totalorder 2, %s18
      // Predicated region
      $region53: #{degree_days_dnn_coord_forward.1} parent=5 // pred_check
        %p625 = pneg %p624
      $region54: #{degree_days_dnn_coord_forward.1} parent=5 // pred_check_branch
        %627 = sbr.rel (%p625) target = $region56
      $region55: #{degree_days_dnn_coord_forward.1} parent=5 // pred_region
        %s628 = ssub.s32 %s18, 2
        // Predicated region
        $region57: #{degree_days_dnn_coord_forward.1} parent=55 // pred_check
          %p629 = pneg %p220
        $region58: #{degree_days_dnn_coord_forward.1} parent=55 // pred_check_branch
          %631 = sbr.rel (%p629) target = $region60
        $region59: #{degree_days_dnn_coord_forward.1} parent=55 // pred_region
          %s632 = sand.u32 %s205, 1
          %s633 = scalar_lea.sflag [#allocation4], %s632
          %s634 = sand.u32 %s205, 1
          %s635 = scalar_lea.vmem [#allocation3], %s634
          %636 = dma.done %s633, 16
        $region60: #{degree_days_dnn_coord_forward.1} parent=55 // pred_fallthru
          _
      $region56: #{degree_days_dnn_coord_forward.1} parent=5 // pred_fallthru
        _
    $region6: #{degree_days_dnn_coord_forward.1} parent=1 // loop_footer
      %s22 = sadd.s32 1, %s18
    $region7: #{degree_days_dnn_coord_forward.1} parent=1 // loop_footer_branch
      %17 = sbr.rel target = $region3
    $region8: #{degree_days_dnn_coord_forward.1} parent=1 // loop_exit
      _
    %637 = vsyncpa [#allocation4], 1
    %s638 = scalar_lea.sflag [#allocation4], 1
    %639 = vsyncpa %s638, 1

</llo_original>
